<compile_context>
chip_gen: v7x
topology: tpu7x:2x2x1
jax: 0.10.0
libtpu: 0.0.40
codegen_flags: <defaults>
</compile_context>

<pallas_src>
import numpy as np
import jax
import jax.numpy as jnp
from jax.experimental import pallas as pl
from jax.experimental.pallas import tpu as pltpu

_EPS_NORMAL = 1e-16
_EPS_BERNOULLI = 1e-3

_LANE = 128
_MAX_TILE_ROWS = 1024          # 1024 x 128 f32 = 512 KiB per tile
_MAX_TILE_BYTES = 4 * 1024 * 1024


def _normalize_kernel(params_ref, x_ref, o_ref):
    # params_ref: (2, cols)  row 0 = offset, row 1 = inv_scale (VMEM-resident,
    # constant index_map -> DMA'd once).  x/o: (tile_rows, cols).
    off = params_ref[0:1, :]
    inv = params_ref[1:2, :]
    o_ref[...] = (x_ref[...] - off) * inv


def _round_up(x, m):
    return ((x + m - 1) // m) * m


def normalizer_combination_normalize(data, offset_full, inv_scale_full, *,
                                      max_tile_rows=_MAX_TILE_ROWS):
    """data: (B, D) f32; offset_full / inv_scale_full: (1, D) f32."""
    B, D = data.shape
    dtype = data.dtype

    # Stack params into a single (2, D) array -> one small DMA instead of two.
    params = jnp.concatenate([offset_full, inv_scale_full], axis=0)  # (2, D)

    # ---- choose lane-dense layout -------------------------------------------------
    if D % _LANE == 0:
        pack, cols = 1, D                      # already lane-dense
    elif _LANE % D == 0:
        pack, cols = _LANE // D, _LANE         # fold `pack` logical rows per lane row
    else:
        pack, cols = 1, D                      # fallback: full-width-D blocks

    if pack > 1:
        B_pad = _round_up(B, pack)
        if B_pad != B:
            data = jnp.pad(data, ((0, B_pad - B), (0, 0)))
        rows = (B_pad * D) // cols
        x2 = data.reshape(rows, cols)
        params2 = jnp.tile(params, (1, pack))  # (2, cols); col j maps to params[j % D]
    else:
        B_pad = B
        rows = B
        x2 = data
        params2 = params

    # ---- choose row tile (sized for v7x's smaller scoped VMEM) --------------------
    cap_by_bytes = max(8, ((_MAX_TILE_BYTES // (cols * 4)) // 8) * 8)
    tile_cap = min(max_tile_rows, cap_by_bytes)
    if rows <= tile_cap:
        tile_rows = rows                       # single step, block == full array rows
        rows_pad = rows
    else:
        tile_rows = tile_cap                   # multiple of 8
        rows_pad = _round_up(rows, tile_rows)
        if rows_pad != rows:
            x2 = jnp.pad(x2, ((0, rows_pad - rows), (0, 0)))

    grid = (rows_pad // tile_rows,)

    out2 = pl.pallas_call(
        _normalize_kernel,
        out_shape=jax.ShapeDtypeStruct((rows_pad, cols), dtype),
        grid_spec=pltpu.PrefetchScalarGridSpec(
            num_scalar_prefetch=0,
            grid=grid,
            in_specs=[
                pl.BlockSpec((2, cols), lambda i: (0, 0)),          # params, resident
                pl.BlockSpec((tile_rows, cols), lambda i: (i, 0)),  # x tiles
            ],
            out_specs=pl.BlockSpec((tile_rows, cols), lambda i: (i, 0)),
        ),
        compiler_params=pltpu.CompilerParams(
            dimension_semantics=("parallel",)),
    )(params2, x2)

    out = out2[:rows]
    if pack > 1:
        out = out.reshape(B_pad, D)[:B]
    else:
        out = out[:B]
    return out


def build_combination_params(sizes, kinds, offset, scale):
    """Fold per-segment normalizer rules into full-length offset / inv_scale.

    sizes: list[int]   per-distribution output sizes (sum == D)
    kinds: list[str]   'normal' or 'bernoulli' per distribution
    offset, scale: np arrays of shape (D,)
    """
    offs, invs = [], []
    start = 0
    for sz, kind in zip(sizes, kinds):
        o = offset[start:start + sz]
        s = scale[start:start + sz]
        if kind == "normal":
            offs.append(o.astype(np.float32))
            invs.append((1.0 / (s.astype(np.float32) + _EPS_NORMAL)).astype(np.float32))
        elif kind == "bernoulli":
            offs.append(np.clip(o, _EPS_BERNOULLI, 1.0 - _EPS_BERNOULLI).astype(np.float32))
            invs.append(np.ones(sz, dtype=np.float32))
        else:
            raise ValueError(kind)
        start += sz
    offset_full = np.concatenate(offs)[None, :]      # (1, D)
    inv_scale_full = np.concatenate(invs)[None, :]   # (1, D)
    return jnp.asarray(offset_full), jnp.asarray(inv_scale_full)


def reference_normalize(data, sizes, kinds, offset, scale):
    """Pure-numpy reference mirroring NormalizerCombination.normalize."""
    outs = []
    start = 0
    for sz, kind in zip(sizes, kinds):
        x = data[:, start:start + sz]
        o = offset[start:start + sz]
        s = scale[start:start + sz]
        if kind == "normal":
            outs.append((x - o) / (s + _EPS_NORMAL))
        else:  # bernoulli
            o_c = np.clip(o, _EPS_BERNOULLI, 1.0 - _EPS_BERNOULLI)
            outs.append(x - o_c)
        start += sz
    return np.concatenate(outs, axis=1)


if __name__ == "__main__":
    # Combination of a NormalDist (size 24) and a BernoulliDist (size 8) -> D=32.
    sizes = [24, 8]
    kinds = ["normal", "bernoulli"]
    D = sum(sizes)

    key = jax.random.PRNGKey(0)
    k_data, k_off, k_scale, k_data2 = jax.random.split(key, 4)

    offset_np = np.asarray(jax.random.uniform(k_off, (D,), minval=-0.5, maxval=0.5),
                           dtype=np.float32)
    scale_np = np.asarray(jax.random.uniform(k_scale, (D,), minval=0.5, maxval=2.0),
                          dtype=np.float32)
    offset_full, inv_scale_full = build_combination_params(sizes, kinds, offset_np, scale_np)

    # --- small primary case: B=8 (single grid step, lane-dense packed 4 rows/lane-row)
    B = 8
    data = jax.random.normal(k_data, (B, D), dtype=jnp.float32)
    out = normalizer_combination_normalize(data, offset_full, inv_scale_full)
    out = jax.block_until_ready(out)
    ref = reference_normalize(np.asarray(data), sizes, kinds, offset_np, scale_np)
    np.testing.assert_allclose(np.asarray(out), np.asarray(ref), rtol=1e-5, atol=1e-5)

    # --- secondary case exercising padding + multi-step parallel grid (B not
    # divisible by the pack factor, packed rows not divisible by the tile).
    B2 = 4102
    data2 = jax.random.normal(k_data2, (B2, D), dtype=jnp.float32)
    out2 = normalizer_combination_normalize(data2, offset_full, inv_scale_full)
    out2 = jax.block_until_ready(out2)
    ref2 = reference_normalize(np.asarray(data2), sizes, kinds, offset_np, scale_np)
    np.testing.assert_allclose(np.asarray(out2), np.asarray(ref2), rtol=1e-5, atol=1e-5)

    # TODO(synk): unnormalize() constructs torch.distributions objects (Bernoulli /
    # Normal / mixtures); that object construction has no Pallas equivalent — only
    # the numeric normalize() hot path is implemented here.
    print("KERNEL_OK")
</pallas_src>

<mosaic_0001>
module attributes {stable_mosaic.version = 11 : i64} {
  func.func @_normalize_kernel(%arg0: i32, %arg1: memref<2x128xf32, #tpu.memory_space<vmem>>, %arg2: memref<2x128xf32, #tpu.memory_space<vmem>>, %arg3: memref<2x128xf32, #tpu.memory_space<vmem>>) attributes {dimension_semantics = [#tpu.dimension_semantics<parallel>], iteration_bounds = array<i64: 1>, scalar_prefetch = 0 : i64, scratch_operands = 0 : i64, tpu.core_type = #tpu.core_type<tc>, window_params = [{pipeline_mode = #tpu.pipeline_mode<synchronous>, transform_indices = @transform_0, window_bounds = array<i64: 2, 128>}, {transform_indices = @transform_1, window_bounds = array<i64: 2, 128>}, {transform_indices = @transform_2, window_bounds = array<i64: 2, 128>}]} {
    %c0 = arith.constant 0 : index
    %c0_0 = arith.constant 0 : index
    %0 = vector.load %arg1[%c0, %c0_0] : memref<2x128xf32, #tpu.memory_space<vmem>>, vector<1x128xf32>
    %c1 = arith.constant 1 : index
    %c0_1 = arith.constant 0 : index
    %1 = vector.load %arg1[%c1, %c0_1] : memref<2x128xf32, #tpu.memory_space<vmem>>, vector<1x128xf32>
    %c0_2 = arith.constant 0 : index
    %c0_3 = arith.constant 0 : index
    %2 = vector.load %arg2[%c0_2, %c0_3] : memref<2x128xf32, #tpu.memory_space<vmem>>, vector<2x128xf32>
    %3 = vector.broadcast %0 : vector<1x128xf32> to vector<2x128xf32>
    %4 = arith.subf %2, %3 : vector<2x128xf32>
    %5 = vector.broadcast %1 : vector<1x128xf32> to vector<2x128xf32>
    %6 = arith.mulf %4, %5 : vector<2x128xf32>
    %c0_4 = arith.constant 0 : index
    %c0_5 = arith.constant 0 : index
    %7 = vector.load %arg3[%c0_4, %c0_5] : memref<2x128xf32, #tpu.memory_space<vmem>>, vector<2x128xf32>
    tpu.vector_store %arg3[%c0_4, %c0_5], %6 {strides = array<i32>} : memref<2x128xf32, #tpu.memory_space<vmem>>, vector<2x128xf32>,
    return
  }
  func.func @transform_0(%arg0: i32) -> (i32, i32) {
    %c0_i32 = arith.constant 0 : i32
    %c0_i32_0 = arith.constant 0 : i32
    %c0_i32_1 = arith.constant 0 : i32
    return %c0_i32, %c0_i32_0 : i32, i32
  }
  func.func @transform_1(%arg0: i32) -> (i32, i32) {
    %c0_i32 = arith.constant 0 : i32
    %c0_i32_0 = arith.constant 0 : i32
    return %arg0, %c0_i32 : i32, i32
  }
  func.func @transform_2(%arg0: i32) -> (i32, i32) {
    %c0_i32 = arith.constant 0 : i32
    %c0_i32_0 = arith.constant 0 : i32
    return %arg0, %c0_i32 : i32, i32
  }
}

</mosaic_0001>

<llo_original>
// kernel: tpu_custom_call.1
$region0: #{tpu_custom_call.1}
  #allocation0 [shape = 'u32[]', space=smem, size = 0x4, offset = 0x4, fixed_abs, tag = 'smem constant byte address 0x4 - core index']
  #allocation1 [shape = 'u32[144,128]{1,0:T(1,128)}', space=vmem, size = 0x12000, scoped, tag = 'internal scratch']
  %s0 = inlined_call_operand.hbm [shape: f32[2,128], index: 0, kind: input, shape index: {}]
  %s1 = inlined_call_operand.vmem [shape: f32[2,128], index: 1, kind: input, shape index: {}]
  %s2 = inlined_call_operand.hbm [shape: f32[2,128], index: 2, kind: output, shape index: {}]
  %s3 = sld [smem:[#allocation0]]
  $region22: #{tpu_custom_call.1} parent=0
    _
  %s5 = ssub.s32 1, %s3
  %s6 = scalar_select 0, %s5, %s3
  $region1: #{tpu_custom_call.1} parent=0
    #allocation2 [shape = 'u8[1024]{0}', space=vmem, size = 0x400, scoped, tag = 'input window, operand 0, single buffered']
    #allocation3 [shape = 's32[1]{0}', space=sflag, size = 0x4, scoped, tag = 'scoped memory for tpu_custom_call.1']
    #allocation4 [shape = 's32[1]{0}', space=sflag, size = 0x4, scoped, tag = 'scoped memory for tpu_custom_call.1']
    #allocation5 [shape = 'u8[1024]{0}', space=vmem, size = 0x400, scoped, tag = 'output window, operand 0, single buffered']
    %7 = vsyncpa [#allocation3], 0
    %8 = vsyncpa [#allocation4], 0
    // Predicated region
    $region2: #{tpu_custom_call.1} parent=1 // pred_check
      _
    $region3: #{tpu_custom_call.1} parent=1 // pred_check_branch
      %10 = sbr.rel (0) target = $region5
    $region4: #{tpu_custom_call.1} parent=1 // pred_region
      %s12 = ssub.s32 32, 32
      %13 = vsyncadd [#allocation3], %s12
      %s15 = sshll.u32 [#allocation2], 4
      %s16 = int_to_ptr.vmem [resolvable:$true] %s15
      %18 = dma.hbm_to_vmem [thread:$0]  %s0, 32, %s16, [#allocation3]
    $region5: #{tpu_custom_call.1} parent=1 // pred_fallthru
      _
    // Predicated region
    $region6: #{tpu_custom_call.1} parent=1 // pred_check
      _
    $region7: #{tpu_custom_call.1} parent=1 // pred_check_branch
      %20 = sbr.rel (0) target = $region9
    $region8: #{tpu_custom_call.1} parent=1 // pred_region
      _
    $region9: #{tpu_custom_call.1} parent=1 // pred_fallthru
      _
    // Predicated region
    $region10: #{tpu_custom_call.1} parent=1 // pred_check
      _
    $region11: #{tpu_custom_call.1} parent=1 // pred_check_branch
      %22 = sbr.rel (0) target = $region13
    $region12: #{tpu_custom_call.1} parent=1 // pred_region
      %23 = dma.done [#allocation3], 32
    $region13: #{tpu_custom_call.1} parent=1 // pred_fallthru
      _
    %v24 = vld [vmem:[#allocation2] sm:$0x1]
    %v25 = vld [vmem:[#allocation2 + $0x1] sm:$0x1]
    %v26 = vld [vmem:[%s1] sm:$0x3]
    %v27 = vlaneseq
    %v28 = vshrl.u32 %v27, 7
    %v29 = vsub.s32 0, %v28
    %v30 = vrot.slane %v24, %v29
    %v31 = vsub.f32 %v26, %v30
    %v32 = vlaneseq
    %v33 = vshrl.u32 %v32, 7
    %v34 = vsub.s32 0, %v33
    %v35 = vrot.slane %v25, %v34
    %v36 = vmul.f32 %v31, %v35
    %37 = vst [vmem:[#allocation5] sm:$0x3] %v36
    // Predicated region
    $region14: #{tpu_custom_call.1} parent=1 // pred_check
      _
    $region15: #{tpu_custom_call.1} parent=1 // pred_check_branch
      %39 = sbr.rel (0) target = $region17
    $region16: #{tpu_custom_call.1} parent=1 // pred_region
      %s41 = ssub.s32 32, 32
      %42 = vsyncadd [#allocation4], %s41
      %s44 = sshll.u32 [#allocation5], 4
      %s45 = int_to_ptr.vmem [resolvable:$true] %s44
      %47 = dma.vmem_to_hbm [thread:$0]  %s45, 32, %s2, [#allocation4]
    $region17: #{tpu_custom_call.1} parent=1 // pred_fallthru
      _
    // Predicated region
    $region18: #{tpu_custom_call.1} parent=1 // pred_check
      _
    $region19: #{tpu_custom_call.1} parent=1 // pred_check_branch
      %49 = sbr.rel (0) target = $region21
    $region20: #{tpu_custom_call.1} parent=1 // pred_region
      %50 = dma.done [#allocation4], 32
    $region21: #{tpu_custom_call.1} parent=1 // pred_fallthru
      _
    %51 = vsyncpa [#allocation3], 1
    %52 = vsyncpa [#allocation4], 1

</llo_original>
